<compile_context>
chip_gen: v7x
topology: tpu7x:2x2x1
jax: 0.10.0
libtpu: 0.0.40
codegen_flags: <defaults>
</compile_context>

<pallas_src>
import jax
import jax.numpy as jnp
from jax.experimental import pallas as pl
from jax.experimental.pallas import tpu as pltpu

HIDDEN = 256


def _round_up(n, m):
    return ((n + m - 1) // m) * m


def _vmem_budget_bytes():
    """Generation-aware (working-set budget, explicit vmem_limit or None)."""
    try:
        cap = int(pltpu.get_tpu_info().vmem_capacity_bytes)  # per TensorCore
    except Exception:
        cap = 0
    if cap >= (96 << 20):   # v5e / v6e: 128 MiB per core
        return 28 << 20, 36 << 20
    if cap >= (48 << 20):   # v7x: 64 MiB per core
        return 20 << 20, 28 << 20
    # Unknown: stay under every generation's *default* scoped-VMEM limit
    # (v5e's is 16 MiB) so we never need to raise vmem_limit_bytes at all.
    return 12 << 20, None


def _mlp_kernel(x_ref, w1_ref, b1_ref, w2_ref, b2_ref, w3_ref, b3_ref, o_ref):
    # Fused 3-layer MLP: two MXU matmuls with f32 accumulation, bias + ReLU on
    # the VPU in f32, final 256->1 layer as VPU multiply + XLU lane reduce.
    cdt = w1_ref.dtype                      # matmul input dtype (bf16 or f32)
    x = x_ref[...].astype(cdt)              # cast on the VPU (x arrives as stored)
    h1 = jnp.dot(x, w1_ref[...], preferred_element_type=jnp.float32) + b1_ref[...]
    h1 = jnp.maximum(h1, 0.0)
    h2 = jnp.dot(h1.astype(cdt), w2_ref[...],
                 preferred_element_type=jnp.float32) + b2_ref[...]
    h2 = jnp.maximum(h2, 0.0)
    # Final layer off the MXU: (tb,256) * (1,256) -> reduce over lanes -> (tb,1).
    out = jnp.sum(h2 * w3_ref[...], axis=-1, keepdims=True) + b3_ref[...]
    o_ref[...] = out.astype(o_ref.dtype)


def baseline_mlp_forward(x, params, *, batch_tile=1024, compute_dtype=jnp.bfloat16):
    """x: any shape whose trailing flatten gives (-1, input_dim).

    compute_dtype: jnp.bfloat16 (default; MXU-native on v5e/v6e/v7x, f32
    accumulation kept) or jnp.float32 (bit-accurate vs. the reference).
    """
    w1, b1, w2, b2, w3, b3 = params
    input_dim = w1.shape[0]
    cdt = jnp.dtype(compute_dtype)

    x2d = x.reshape(-1, input_dim)
    if x2d.dtype not in (jnp.dtype(jnp.float32), jnp.dtype(jnp.bfloat16)):
        x2d = x2d.astype(jnp.float32)
    B = x2d.shape[0]

    # Matmul weights in compute dtype; all elementwise math stays f32.
    w1c = w1.astype(cdt)
    w2c = w2.astype(cdt)
    b1f = b1.astype(jnp.float32).reshape(1, HIDDEN)
    b2f = b2.astype(jnp.float32).reshape(1, HIDDEN)
    w3r = w3.astype(jnp.float32).reshape(1, HIDDEN)   # real weight row (VPU layer)
    b3f = b3.astype(jnp.float32).reshape(1, 1)

    # MXU-friendly batch tile (multiple of 128), clamped for small batches.
    tb = max(128, _round_up(min(int(batch_tile), max(B, 1)), 128))
    # v7x megacore: keep >= 2 grid steps when there's enough work so the
    # "parallel" batch axis can shard across both TensorCores.
    if B > 128:
        tb = min(tb, _round_up((B + 1) // 2, 128))

    budget, vmem_limit = _vmem_budget_bytes()
    x_b = x2d.dtype.itemsize
    c_b = cdt.itemsize

    def vmem_bytes(t):
        # Conservative per-step working set (default double-buffered pipeline;
        # resident weights counted x2 as well).
        return (2 * t * input_dim * x_b                              # x tile
                + 2 * t * 512                                        # (t,1) out tile (lane-padded)
                + 2 * (input_dim * HIDDEN + HIDDEN * HIDDEN) * c_b   # W1, W2
                + 2 * (3 * HIDDEN + 1) * 4                           # b1,b2,w3 row,b3
                + t * input_dim * c_b                                # x cast copy
                + 2 * t * HIDDEN * 4                                 # h1, h2 (f32)
                + t * HIDDEN * c_b)                                  # h1 cast copy

    while tb > 128 and vmem_bytes(tb) > budget:
        tb = max(128, _round_up(tb // 2, 128))
    # TODO(synk): for very large input_dim (>~8K) add a K-tiled first layer
    # (extra "arbitrary" grid axis + f32 accumulator scratch) and mark the
    # resident W1/W2 specs pipeline_mode=pl.Buffered(1) instead of shrinking tb.

    B_pad = _round_up(B, tb)
    if B_pad != B:
        x2d = jnp.pad(x2d, ((0, B_pad - B), (0, 0)))

    grid = (B_pad // tb,)

    flops = 2 * B_pad * (input_dim * HIDDEN + HIDDEN * HIDDEN + HIDDEN)
    bytes_accessed = (B_pad * input_dim * x_b + B_pad * 4
                      + (input_dim * HIDDEN + HIDDEN * HIDDEN) * c_b
                      + (3 * HIDDEN + 1) * 4)
    cost = pl.CostEstimate(flops=flops, transcendentals=0,
                           bytes_accessed=bytes_accessed)

    cp_kwargs = dict(dimension_semantics=("parallel",))
    if vmem_limit is not None:
        cp_kwargs["vmem_limit_bytes"] = int(vmem_limit)

    out = pl.pallas_call(
        _mlp_kernel,
        out_shape=jax.ShapeDtypeStruct((B_pad, 1), jnp.float32),
        grid_spec=pltpu.PrefetchScalarGridSpec(
            num_scalar_prefetch=0,
            grid=grid,
            in_specs=[
                pl.BlockSpec((tb, input_dim), lambda i: (i, 0)),      # x tile
                pl.BlockSpec((input_dim, HIDDEN), lambda i: (0, 0)),  # W1 (resident)
                pl.BlockSpec((1, HIDDEN), lambda i: (0, 0)),          # b1
                pl.BlockSpec((HIDDEN, HIDDEN), lambda i: (0, 0)),     # W2 (resident)
                pl.BlockSpec((1, HIDDEN), lambda i: (0, 0)),          # b2
                pl.BlockSpec((1, HIDDEN), lambda i: (0, 0)),          # W3 row (f32)
                pl.BlockSpec((1, 1), lambda i: (0, 0)),               # b3
            ],
            out_specs=pl.BlockSpec((tb, 1), lambda i: (i, 0)),
        ),
        compiler_params=pltpu.CompilerParams(**cp_kwargs),
        cost_estimate=cost,
    )(x2d, w1c, b1f, w2c, b2f, w3r, b3f)

    # Drop batch padding; output is already (B_pad, 1).
    return out[:B]


def init_params(key, input_dim):
    """Deterministic synthetic init (matching nn.Linear layer shapes)."""
    k1, k2, k3, k4, k5, k6 = jax.random.split(key, 6)

    def lin_init(kw, kb, fan_in, fan_out):
        bound = 1.0 / jnp.sqrt(fan_in)
        w = jax.random.uniform(kw, (fan_in, fan_out), jnp.float32, -bound, bound)
        b = jax.random.uniform(kb, (1, fan_out), jnp.float32, -bound, bound)
        return w, b

    w1, b1 = lin_init(k1, k2, input_dim, HIDDEN)
    w2, b2 = lin_init(k3, k4, HIDDEN, HIDDEN)
    w3, b3 = lin_init(k5, k6, HIDDEN, 1)
    return (w1, b1, w2, b2, w3, b3)


def reference_forward(x, params):
    w1, b1, w2, b2, w3, b3 = params
    input_dim = w1.shape[0]
    x2d = x.reshape(-1, input_dim).astype(jnp.float32)
    h1 = jnp.maximum(x2d @ w1 + b1, 0.0)
    h2 = jnp.maximum(h1 @ w2 + b2, 0.0)
    return h2 @ w3 + b3


if __name__ == "__main__":
    key = jax.random.PRNGKey(0)
    kx, kp = jax.random.split(key)

    input_dim = 32
    # x of shape (2, 8, 32) -> view(-1, 32) gives a batch of 16 rows.
    x = jax.random.normal(kx, (2, 8, input_dim), jnp.float32)
    params = init_params(kp, input_dim)

    ref = reference_forward(x, params)

    # f32 matmul-input path: tight check against the pure-JAX reference.
    out_f32 = jax.block_until_ready(
        baseline_mlp_forward(x, params, compute_dtype=jnp.float32))
    assert out_f32.shape == (16, 1), out_f32.shape
    assert jnp.allclose(out_f32, ref, atol=1e-4, rtol=1e-4), \
        float(jnp.max(jnp.abs(out_f32 - ref)))

    # Default bf16 matmul-input path (f32 accumulation): looser tolerance.
    out_bf16 = jax.block_until_ready(baseline_mlp_forward(x, params))
    assert out_bf16.shape == (16, 1), out_bf16.shape
    assert bool(jnp.all(jnp.isfinite(out_bf16)))
    assert jnp.allclose(out_bf16, ref, atol=2e-1, rtol=2e-1), \
        float(jnp.max(jnp.abs(out_bf16 - ref)))

    print("KERNEL_OK")
</pallas_src>

<mosaic_0001>
module attributes {stable_mosaic.version = 11 : i64} {
  func.func @_mlp_kernel(%arg0: i32, %arg1: memref<128x32xf32, #tpu.memory_space<vmem>>, %arg2: memref<32x256xf32, #tpu.memory_space<vmem>>, %arg3: memref<1x256xf32, #tpu.memory_space<vmem>>, %arg4: memref<256x256xf32, #tpu.memory_space<vmem>>, %arg5: memref<1x256xf32, #tpu.memory_space<vmem>>, %arg6: memref<1x256xf32, #tpu.memory_space<vmem>>, %arg7: memref<1x1xf32, #tpu.memory_space<vmem>>, %arg8: memref<128x1xf32, #tpu.memory_space<vmem>>) attributes {dimension_semantics = [#tpu.dimension_semantics<parallel>], iteration_bounds = array<i64: 1>, scalar_prefetch = 0 : i64, scratch_operands = 0 : i64, tpu.core_type = #tpu.core_type<tc>, window_params = [{transform_indices = @transform_0, window_bounds = array<i64: 128, 32>}, {pipeline_mode = #tpu.pipeline_mode<synchronous>, transform_indices = @transform_1, window_bounds = array<i64: 32, 256>}, {pipeline_mode = #tpu.pipeline_mode<synchronous>, transform_indices = @transform_2, window_bounds = array<i64: 1, 256>}, {pipeline_mode = #tpu.pipeline_mode<synchronous>, transform_indices = @transform_3, window_bounds = array<i64: 256, 256>}, {pipeline_mode = #tpu.pipeline_mode<synchronous>, transform_indices = @transform_4, window_bounds = array<i64: 1, 256>}, {pipeline_mode = #tpu.pipeline_mode<synchronous>, transform_indices = @transform_5, window_bounds = array<i64: 1, 256>}, {pipeline_mode = #tpu.pipeline_mode<synchronous>, transform_indices = @transform_6, window_bounds = array<i64: 1, 1>}, {transform_indices = @transform_7, window_bounds = array<i64: 128, 1>}]} {
    %c0 = arith.constant 0 : index
    %c0_0 = arith.constant 0 : index
    %0 = vector.load %arg1[%c0, %c0_0] : memref<128x32xf32, #tpu.memory_space<vmem>>, vector<128x32xf32>
    %c0_1 = arith.constant 0 : index
    %c0_2 = arith.constant 0 : index
    %1 = vector.load %arg2[%c0_1, %c0_2] : memref<32x256xf32, #tpu.memory_space<vmem>>, vector<32x256xf32>
    %cst = arith.constant dense<0.000000e+00> : vector<128x256xf32>
    %2 = tpu.matmul %0, %1, %cst {dimension_numbers = #tpu.dot_dimension_numbers<[1], [0], [0], [1], [0, 0, 1, 1], [], []>} : vector<128x32xf32>, vector<32x256xf32>, vector<128x256xf32> -> vector<128x256xf32>
    %c0_3 = arith.constant 0 : index
    %c0_4 = arith.constant 0 : index
    %3 = vector.load %arg3[%c0_3, %c0_4] : memref<1x256xf32, #tpu.memory_space<vmem>>, vector<1x256xf32>
    %4 = vector.broadcast %3 : vector<1x256xf32> to vector<128x256xf32>
    %5 = arith.addf %2, %4 : vector<128x256xf32>
    %cst_5 = arith.constant 0.000000e+00 : f32
    %6 = vector.broadcast %cst_5 : f32 to vector<128x256xf32>
    %7 = arith.maximumf %5, %6 : vector<128x256xf32>
    %c0_6 = arith.constant 0 : index
    %c0_7 = arith.constant 0 : index
    %8 = vector.load %arg4[%c0_6, %c0_7] : memref<256x256xf32, #tpu.memory_space<vmem>>, vector<256x256xf32>
    %cst_8 = arith.constant dense<0.000000e+00> : vector<128x256xf32>
    %9 = tpu.matmul %7, %8, %cst_8 {dimension_numbers = #tpu.dot_dimension_numbers<[1], [0], [0], [1], [0, 0, 1, 1], [], []>} : vector<128x256xf32>, vector<256x256xf32>, vector<128x256xf32> -> vector<128x256xf32>
    %c0_9 = arith.constant 0 : index
    %c0_10 = arith.constant 0 : index
    %10 = vector.load %arg5[%c0_9, %c0_10] : memref<1x256xf32, #tpu.memory_space<vmem>>, vector<1x256xf32>
    %11 = vector.broadcast %10 : vector<1x256xf32> to vector<128x256xf32>
    %12 = arith.addf %9, %11 : vector<128x256xf32>
    %cst_11 = arith.constant 0.000000e+00 : f32
    %13 = vector.broadcast %cst_11 : f32 to vector<128x256xf32>
    %14 = arith.maximumf %12, %13 : vector<128x256xf32>
    %c0_12 = arith.constant 0 : index
    %c0_13 = arith.constant 0 : index
    %15 = vector.load %arg6[%c0_12, %c0_13] : memref<1x256xf32, #tpu.memory_space<vmem>>, vector<1x256xf32>
    %16 = vector.broadcast %15 : vector<1x256xf32> to vector<128x256xf32>
    %17 = arith.mulf %14, %16 : vector<128x256xf32>
    %cst_14 = arith.constant dense<0.000000e+00> : vector<128xf32>
    %18 = vector.multi_reduction <add>, %17, %cst_14 [1] : vector<128x256xf32> to vector<128xf32>
    %19 = vector.shape_cast %18 : vector<128xf32> to vector<128x1xf32>
    %c0_15 = arith.constant 0 : index
    %c0_16 = arith.constant 0 : index
    %20 = vector.load %arg7[%c0_15, %c0_16] : memref<1x1xf32, #tpu.memory_space<vmem>>, vector<1x1xf32>
    %21 = vector.broadcast %20 : vector<1x1xf32> to vector<128x1xf32>
    %22 = arith.addf %19, %21 : vector<128x1xf32>
    %c0_17 = arith.constant 0 : index
    %c0_18 = arith.constant 0 : index
    %23 = vector.load %arg8[%c0_17, %c0_18] : memref<128x1xf32, #tpu.memory_space<vmem>>, vector<128x1xf32>
    tpu.vector_store %arg8[%c0_17, %c0_18], %22 {strides = array<i32>} : memref<128x1xf32, #tpu.memory_space<vmem>>, vector<128x1xf32>,
    return
  }
  func.func @transform_0(%arg0: i32) -> (i32, i32) {
    %c0_i32 = arith.constant 0 : i32
    %c0_i32_0 = arith.constant 0 : i32
    return %arg0, %c0_i32 : i32, i32
  }
  func.func @transform_1(%arg0: i32) -> (i32, i32) {
    %c0_i32 = arith.constant 0 : i32
    %c0_i32_0 = arith.constant 0 : i32
    %c0_i32_1 = arith.constant 0 : i32
    return %c0_i32, %c0_i32_0 : i32, i32
  }
  func.func @transform_2(%arg0: i32) -> (i32, i32) {
    %c0_i32 = arith.constant 0 : i32
    %c0_i32_0 = arith.constant 0 : i32
    %c0_i32_1 = arith.constant 0 : i32
    return %c0_i32, %c0_i32_0 : i32, i32
  }
  func.func @transform_3(%arg0: i32) -> (i32, i32) {
    %c0_i32 = arith.constant 0 : i32
    %c0_i32_0 = arith.constant 0 : i32
    %c0_i32_1 = arith.constant 0 : i32
    return %c0_i32, %c0_i32_0 : i32, i32
  }
  func.func @transform_4(%arg0: i32) -> (i32, i32) {
    %c0_i32 = arith.constant 0 : i32
    %c0_i32_0 = arith.constant 0 : i32
    %c0_i32_1 = arith.constant 0 : i32
    return %c0_i32, %c0_i32_0 : i32, i32
  }
  func.func @transform_5(%arg0: i32) -> (i32, i32) {
    %c0_i32 = arith.constant 0 : i32
    %c0_i32_0 = arith.constant 0 : i32
    %c0_i32_1 = arith.constant 0 : i32
    return %c0_i32, %c0_i32_0 : i32, i32
  }
  func.func @transform_6(%arg0: i32) -> (i32, i32) {
    %c0_i32 = arith.constant 0 : i32
    %c0_i32_0 = arith.constant 0 : i32
    %c0_i32_1 = arith.constant 0 : i32
    return %c0_i32, %c0_i32_0 : i32, i32
  }
  func.func @transform_7(%arg0: i32) -> (i32, i32) {
    %c0_i32 = arith.constant 0 : i32
    %c0_i32_0 = arith.constant 0 : i32
    return %arg0, %c0_i32 : i32, i32
  }
}

</mosaic_0001>

<llo_original>
// kernel: tpu_custom_call.1
$region0: #{tpu_custom_call.1}
  #allocation0 [shape = 'u32[]', space=smem, size = 0x4, offset = 0x4, fixed_abs, tag = 'smem constant byte address 0x4 - core index']
  #allocation1 [shape = 'u32[144,128]{1,0:T(1,128)}', space=vmem, size = 0x12000, scoped, tag = 'internal scratch']
  #allocation2 [shape = 'f32[1,1]{1,0:T(1,128)S(1)}', space=vmem, size = 0x200, scoped, tag = 'scoped memory for tpu_custom_call.1']
  %s0 = inlined_call_operand.vmem [shape: f32[128,32], index: 0, kind: input, shape index: {}]
  %s1 = inlined_call_operand.vmem [shape: f32[32,256], index: 1, kind: input, shape index: {}]
  %s2 = inlined_call_operand.vmem [shape: f32[1,256], index: 2, kind: input, shape index: {}]
  %s3 = inlined_call_operand.hbm [shape: f32[256,256], index: 3, kind: input, shape index: {}]
  %s4 = inlined_call_operand.vmem [shape: f32[1,256], index: 4, kind: input, shape index: {}]
  %s5 = inlined_call_operand.vmem [shape: f32[1,256], index: 5, kind: input, shape index: {}]
  %s6 = inlined_call_operand.<no memory space> [shape: f32[1,1], index: 6, kind: input, shape index: {}]
  %s7 = inlined_call_operand.vmem [shape: f32[128,1], index: 7, kind: output, shape index: {}]
  %s8 = sld [smem:[#allocation0]]
  $region42: #{tpu_custom_call.1} parent=0
    _
  %s10 = ssub.s32 1, %s8
  %s11 = scalar_select 0, %s10, %s8
  %v12 = vstv %s6
  %13 = vst [vmem:[#allocation2] sm:$0x1] %v12
  $region1: #{tpu_custom_call.1} parent=0
    #allocation3 [shape = 'u8[262144]{0}', space=vmem, size = 0x40000, scoped, tag = 'input window, operand 3, single buffered']
    #allocation4 [shape = 's32[1]{0}', space=sflag, size = 0x4, scoped, tag = 'scoped memory for tpu_custom_call.1']
    %14 = vsyncpa [#allocation4], 0
    // Predicated region
    $region2: #{tpu_custom_call.1} parent=1 // pred_check
      _
    $region3: #{tpu_custom_call.1} parent=1 // pred_check_branch
      %16 = sbr.rel (0) target = $region5
    $region4: #{tpu_custom_call.1} parent=1 // pred_region
      _
    $region5: #{tpu_custom_call.1} parent=1 // pred_fallthru
      _
    // Predicated region
    $region6: #{tpu_custom_call.1} parent=1 // pred_check
      _
    $region7: #{tpu_custom_call.1} parent=1 // pred_check_branch
      %18 = sbr.rel (0) target = $region9
    $region8: #{tpu_custom_call.1} parent=1 // pred_region
      _
    $region9: #{tpu_custom_call.1} parent=1 // pred_fallthru
      _
    // Predicated region
    $region10: #{tpu_custom_call.1} parent=1 // pred_check
      _
    $region11: #{tpu_custom_call.1} parent=1 // pred_check_branch
      %20 = sbr.rel (0) target = $region13
    $region12: #{tpu_custom_call.1} parent=1 // pred_region
      _
    $region13: #{tpu_custom_call.1} parent=1 // pred_fallthru
      _
    // Predicated region
    $region14: #{tpu_custom_call.1} parent=1 // pred_check
      _
    $region15: #{tpu_custom_call.1} parent=1 // pred_check_branch
      %22 = sbr.rel (0) target = $region17
    $region16: #{tpu_custom_call.1} parent=1 // pred_region
      %s24 = ssub.s32 8192, 8192
      %25 = vsyncadd [#allocation4], %s24
      %s26 = sshll.u32 [#allocation3], 4
      %s27 = int_to_ptr.vmem [resolvable:$true] %s26
      %32 = dma.hbm_to_vmem [thread:$0]  %s3, 8192, %s27, [#allocation4], 256, 256, 16
    $region17: #{tpu_custom_call.1} parent=1 // pred_fallthru
      _
    // Predicated region
    $region18: #{tpu_custom_call.1} parent=1 // pred_check
      _
    $region19: #{tpu_custom_call.1} parent=1 // pred_check_branch
      %34 = sbr.rel (0) target = $region21
    $region20: #{tpu_custom_call.1} parent=1 // pred_region
      _
    $region21: #{tpu_custom_call.1} parent=1 // pred_fallthru
      _
    // Predicated region
    $region22: #{tpu_custom_call.1} parent=1 // pred_check
      _
    $region23: #{tpu_custom_call.1} parent=1 // pred_check_branch
      %36 = sbr.rel (0) target = $region25
    $region24: #{tpu_custom_call.1} parent=1 // pred_region
      _
    $region25: #{tpu_custom_call.1} parent=1 // pred_fallthru
      _
    // Predicated region
    $region26: #{tpu_custom_call.1} parent=1 // pred_check
      _
    $region27: #{tpu_custom_call.1} parent=1 // pred_check_branch
      %38 = sbr.rel (0) target = $region29
    $region28: #{tpu_custom_call.1} parent=1 // pred_region
      _
    $region29: #{tpu_custom_call.1} parent=1 // pred_fallthru
      _
    // Predicated region
    $region30: #{tpu_custom_call.1} parent=1 // pred_check
      _
    $region31: #{tpu_custom_call.1} parent=1 // pred_check_branch
      %40 = sbr.rel (0) target = $region33
    $region32: #{tpu_custom_call.1} parent=1 // pred_region
      %41 = dma.done [#allocation4], 8192
    $region33: #{tpu_custom_call.1} parent=1 // pred_fallthru
      _
    %v42 = vld [vmem:[%s0] sm:$0xff]
    %v43 = vld [vmem:[%s0 + $0x8] sm:$0xff]
    %v44 = vld [vmem:[%s0 + $0x10] sm:$0xff]
    %v45 = vld [vmem:[%s0 + $0x18] sm:$0xff]
    %v46 = vld [vmem:[%s0 + $0x20] sm:$0xff]
    %v47 = vld [vmem:[%s0 + $0x28] sm:$0xff]
    %v48 = vld [vmem:[%s0 + $0x30] sm:$0xff]
    %v49 = vld [vmem:[%s0 + $0x38] sm:$0xff]
    %v50 = vld [vmem:[%s0 + $0x40] sm:$0xff]
    %v51 = vld [vmem:[%s0 + $0x48] sm:$0xff]
    %v52 = vld [vmem:[%s0 + $0x50] sm:$0xff]
    %v53 = vld [vmem:[%s0 + $0x58] sm:$0xff]
    %v54 = vld [vmem:[%s0 + $0x60] sm:$0xff]
    %v55 = vld [vmem:[%s0 + $0x68] sm:$0xff]
    %v56 = vld [vmem:[%s0 + $0x70] sm:$0xff]
    %v57 = vld [vmem:[%s0 + $0x78] sm:$0xff]
    %v58 = vld [vmem:[%s1] sm:$0xff]
    %v59 = vld [vmem:[%s1 + $0x8] sm:$0xff]
    %v60 = vld [vmem:[%s1 + $0x10] sm:$0xff]
    %v61 = vld [vmem:[%s1 + $0x18] sm:$0xff]
    %v62 = vld [vmem:[%s1 + $0x20] sm:$0xff]
    %v63 = vld [vmem:[%s1 + $0x28] sm:$0xff]
    %v64 = vld [vmem:[%s1 + $0x30] sm:$0xff]
    %v65 = vld [vmem:[%s1 + $0x38] sm:$0xff]
    %v66 = vld [vmem:[%s2] sm:$0x3]
    %v68 = vlaneseq
    %v69 = vshrl.u32 %v68, 7
    %v70 = vsub.s32 0, %v69
    %v71 = vrot.slane %v66, %v70
    %v72 = vlaneseq
    %v73 = vshrl.u32 %v72, 7
    %v74 = vsub.s32 1, %v73
    %v75 = vrot.slane %v66, %v74
    %vm78 = vcmask 261120
    %v80 = vsel %vm78, %v42, 0
    %v83 = vsel %vm78, %v43, 0
    %v86 = vsel %vm78, %v44, 0
    %v89 = vsel %vm78, %v45, 0
    %v92 = vsel %vm78, %v46, 0
    %v95 = vsel %vm78, %v47, 0
    %v98 = vsel %vm78, %v48, 0
    %v101 = vsel %vm78, %v49, 0
    %v104 = vsel %vm78, %v50, 0
    %v107 = vsel %vm78, %v51, 0
    %v110 = vsel %vm78, %v52, 0
    %v113 = vsel %vm78, %v53, 0
    %v116 = vsel %vm78, %v54, 0
    %v119 = vsel %vm78, %v55, 0
    %v122 = vsel %vm78, %v56, 0
    %v125 = vsel %vm78, %v57, 0
    %127 = vmatprep.subr.mxu0 %v59
    %128 = vmatpush1.msra.mxu0 %v58
    %129 = vmatprep.subr.mxu0 %v61
    %130 = vmatpush1.msra.mxu0 %v60
    %131 = vmatprep.subr.mxu0 %v63
    %132 = vmatpush1.msra.mxu0 %v62
    %133 = vmatprep.subr.mxu0 %v65
    %134 = vmatpush1.msra.mxu0 %v64
    %135 = vmatprep.subr.mxu0 0.0
    %136 = vmatpush1.msra.mxu0 0.0
    %137 = vmatprep.subr.mxu0 0.0
    %138 = vmatpush1.msra.mxu0 0.0
    %139 = vmatprep.subr.mxu0 0.0
    %140 = vmatpush1.msra.mxu0 0.0
    %141 = vmatprep.subr.mxu0 0.0
    %142 = vmatpush1.msra.mxu0 0.0
    %143 = vmatprep.subr.mxu0 0.0
    %144 = vmatpush1.msra.mxu0 0.0
    %145 = vmatprep.subr.mxu0 0.0
    %146 = vmatpush1.msra.mxu0 0.0
    %147 = vmatprep.subr.mxu0 0.0
    %148 = vmatpush1.msra.mxu0 0.0
    %149 = vmatprep.subr.mxu0 0.0
    %150 = vmatpush1.msra.mxu0 0.0
    %151 = vmatprep.subr.mxu0 0.0
    %152 = vmatpush1.msra.mxu0 0.0
    %153 = vmatprep.subr.mxu0 0.0
    %154 = vmatpush1.msra.mxu0 0.0
    %155 = vmatprep.subr.mxu0 0.0
    %156 = vmatpush1.msra.mxu0 0.0
    %157 = vmatprep.subr.mxu0 0.0
    %158 = vmatpush1.msra.mxu0 0.0
    %159 = vmatprep.subr.mxu0 0.0
    %160 = vmatpush1.msra.mxu0 0.0
    %161 = vmatprep.subr.mxu0 0.0
    %162 = vmatpush1.msra.mxu0 0.0
    %163 = vmatprep.subr.mxu0 0.0
    %164 = vmatpush1.msra.mxu0 0.0
    %165 = vmatprep.subr.mxu0 0.0
    %166 = vmatpush1.msra.mxu0 0.0
    %167 = vmatprep.subr.mxu0 0.0
    %168 = vmatpush1.msra.mxu0 0.0
    %169 = vmatprep.subr.mxu0 0.0
    %170 = vmatpush1.msra.mxu0 0.0
    %171 = vmatprep.subr.mxu0 0.0
    %172 = vmatpush1.msra.mxu0 0.0
    %173 = vmatprep.subr.mxu0 0.0
    %174 = vmatpush1.msra.mxu0 0.0
    %175 = vmatprep.subr.mxu0 0.0
    %176 = vmatpush1.msra.mxu0 0.0
    %177 = vmatprep.subr.mxu0 0.0
    %178 = vmatpush1.msra.mxu0 0.0
    %179 = vmatprep.subr.mxu0 0.0
    %180 = vmatpush1.msra.mxu0 0.0
    %181 = vmatprep.subr.mxu0 0.0
    %182 = vmatpush1.msra.mxu0 0.0
    %183 = vmatprep.subr.mxu0 0.0
    %184 = vmatpush1.msra.mxu0 0.0
    %185 = vmatprep.subr.mxu0 0.0
    %186 = vmatpush1.msra.mxu0 0.0
    %187 = vmatprep.subr.mxu0 0.0
    %188 = vmatpush1.msra.mxu0 0.0
    %189 = vmatprep.subr.mxu0 0.0
    %190 = vmatpush1.msra.mxu0 0.0
    %191 = vmatprep.mubr.f32.mxu0 0.0
    %192 = vmatmul.mubr.f32.gmra.mrb[0].mxu0 %v80
    %v193 = vpop.f32.mrb[0].mxu0
    %v194 = vadd.f32 %v71, %v193
    %v195 = vpop.f32.mrb[0].mxu0
    %v196 = vadd.f32 %v75, %v195
    %197 = vmatprep.mubr.f32.mxu0 0.0
    %198 = vmatmul.mubr.f32.gmra.mrb[0].mxu0 %v83
    %v199 = vpop.f32.mrb[0].mxu0
    %v200 = vadd.f32 %v71, %v199
    %v201 = vpop.f32.mrb[0].mxu0
    %v202 = vadd.f32 %v75, %v201
    %203 = vmatprep.mubr.f32.mxu0 0.0
    %204 = vmatmul.mubr.f32.gmra.mrb[0].mxu0 %v86
    %v205 = vpop.f32.mrb[0].mxu0
    %v206 = vadd.f32 %v71, %v205
    %v207 = vpop.f32.mrb[0].mxu0
    %v208 = vadd.f32 %v75, %v207
    %209 = vmatprep.mubr.f32.mxu0 0.0
    %210 = vmatmul.mubr.f32.gmra.mrb[0].mxu0 %v89
    %v211 = vpop.f32.mrb[0].mxu0
    %v212 = vadd.f32 %v71, %v211
    %v213 = vpop.f32.mrb[0].mxu0
    %v214 = vadd.f32 %v75, %v213
    %215 = vmatprep.mubr.f32.mxu0 0.0
    %216 = vmatmul.mubr.f32.gmra.mrb[0].mxu0 %v92
    %v217 = vpop.f32.mrb[0].mxu0
    %v218 = vadd.f32 %v71, %v217
    %v219 = vpop.f32.mrb[0].mxu0
    %v220 = vadd.f32 %v75, %v219
    %221 = vmatprep.mubr.f32.mxu0 0.0
    %222 = vmatmul.mubr.f32.gmra.mrb[0].mxu0 %v95
    %v223 = vpop.f32.mrb[0].mxu0
    %v224 = vadd.f32 %v71, %v223
    %v225 = vpop.f32.mrb[0].mxu0
    %v226 = vadd.f32 %v75, %v225
    %227 = vmatprep.mubr.f32.mxu0 0.0
    %228 = vmatmul.mubr.f32.gmra.mrb[0].mxu0 %v98
    %v229 = vpop.f32.mrb[0].mxu0
    %v230 = vadd.f32 %v71, %v229
    %v231 = vpop.f32.mrb[0].mxu0
    %v232 = vadd.f32 %v75, %v231
    %233 = vmatprep.mubr.f32.mxu0 0.0
    %234 = vmatmul.mubr.f32.gmra.mrb[0].mxu0 %v101
    %v235 = vpop.f32.mrb[0].mxu0
    %v236 = vadd.f32 %v71, %v235
    %v237 = vpop.f32.mrb[0].mxu0
    %v238 = vadd.f32 %v75, %v237
    %239 = vmatprep.mubr.f32.mxu0 0.0
    %240 = vmatmul.mubr.f32.gmra.mrb[0].mxu0 %v104
    %v241 = vpop.f32.mrb[0].mxu0
    %v242 = vadd.f32 %v71, %v241
    %v243 = vpop.f32.mrb[0].mxu0
    %v244 = vadd.f32 %v75, %v243
    %245 = vmatprep.mubr.f32.mxu0 0.0
    %246 = vmatmul.mubr.f32.gmra.mrb[0].mxu0 %v107
    %v247 = vpop.f32.mrb[0].mxu0
    %v248 = vadd.f32 %v71, %v247
    %v249 = vpop.f32.mrb[0].mxu0
    %v250 = vadd.f32 %v75, %v249
    %251 = vmatprep.mubr.f32.mxu0 0.0
    %252 = vmatmul.mubr.f32.gmra.mrb[0].mxu0 %v110
    %v253 = vpop.f32.mrb[0].mxu0
    %v254 = vadd.f32 %v71, %v253
    %v255 = vpop.f32.mrb[0].mxu0
    %v256 = vadd.f32 %v75, %v255
    %257 = vmatprep.mubr.f32.mxu0 0.0
    %258 = vmatmul.mubr.f32.gmra.mrb[0].mxu0 %v113
    %v259 = vpop.f32.mrb[0].mxu0
    %v260 = vadd.f32 %v71, %v259
    %v261 = vpop.f32.mrb[0].mxu0
    %v262 = vadd.f32 %v75, %v261
    %263 = vmatprep.mubr.f32.mxu0 0.0
    %264 = vmatmul.mubr.f32.gmra.mrb[0].mxu0 %v116
    %v265 = vpop.f32.mrb[0].mxu0
    %v266 = vadd.f32 %v71, %v265
    %v267 = vpop.f32.mrb[0].mxu0
    %v268 = vadd.f32 %v75, %v267
    %269 = vmatprep.mubr.f32.mxu0 0.0
    %270 = vmatmul.mubr.f32.gmra.mrb[0].mxu0 %v119
    %v271 = vpop.f32.mrb[0].mxu0
    %v272 = vadd.f32 %v71, %v271
    %v273 = vpop.f32.mrb[0].mxu0
    %v274 = vadd.f32 %v75, %v273
    %275 = vmatprep.mubr.f32.mxu0 0.0
    %276 = vmatmul.mubr.f32.gmra.mrb[0].mxu0 %v122
    %v277 = vpop.f32.mrb[0].mxu0
    %v278 = vadd.f32 %v71, %v277
    %v279 = vpop.f32.mrb[0].mxu0
    %v280 = vadd.f32 %v75, %v279
    %281 = vmatprep.mubr.f32.mxu0 0.0
    %282 = vmatmul.mubr.f32.gmra.mrb[0].mxu0 %v125
    %v283 = vpop.f32.mrb[0].mxu0
    %v284 = vadd.f32 %v71, %v283
    %v285 = vpop.f32.mrb[0].mxu0
    %v286 = vadd.f32 %v75, %v285
    %287 = vdwg.mxu0
    %v288 = vmax.f32 %v194, 0.0
    %v289 = vmax.f32 %v196, 0.0
    %v290 = vmax.f32 %v200, 0.0
    %v291 = vmax.f32 %v202, 0.0
    %v292 = vmax.f32 %v206, 0.0
    %v293 = vmax.f32 %v208, 0.0
    %v294 = vmax.f32 %v212, 0.0
    %v295 = vmax.f32 %v214, 0.0
    %v296 = vmax.f32 %v218, 0.0
    %v297 = vmax.f32 %v220, 0.0
    %v298 = vmax.f32 %v224, 0.0
    %v299 = vmax.f32 %v226, 0.0
    %v300 = vmax.f32 %v230, 0.0
    %v301 = vmax.f32 %v232, 0.0
    %v302 = vmax.f32 %v236, 0.0
    %v303 = vmax.f32 %v238, 0.0
    %v304 = vmax.f32 %v242, 0.0
    %v305 = vmax.f32 %v244, 0.0
    %v306 = vmax.f32 %v248, 0.0
    %v307 = vmax.f32 %v250, 0.0
    %v308 = vmax.f32 %v254, 0.0
    %v309 = vmax.f32 %v256, 0.0
    %v310 = vmax.f32 %v260, 0.0
    %v311 = vmax.f32 %v262, 0.0
    %v312 = vmax.f32 %v266, 0.0
    %v313 = vmax.f32 %v268, 0.0
    %v314 = vmax.f32 %v272, 0.0
    %v315 = vmax.f32 %v274, 0.0
    %v316 = vmax.f32 %v278, 0.0
    %v317 = vmax.f32 %v280, 0.0
    %v318 = vmax.f32 %v284, 0.0
    %v319 = vmax.f32 %v286, 0.0
    %v320 = vld [vmem:[#allocation3] sm:$0xff]
    %v321 = vld [vmem:[#allocation3 + $0x8] sm:$0xff]
    %v322 = vld [vmem:[#allocation3 + $0x10] sm:$0xff]
    %v323 = vld [vmem:[#allocation3 + $0x18] sm:$0xff]
    %v324 = vld [vmem:[#allocation3 + $0x20] sm:$0xff]
    %v325 = vld [vmem:[#allocation3 + $0x28] sm:$0xff]
    %v326 = vld [vmem:[#allocation3 + $0x30] sm:$0xff]
    %v327 = vld [vmem:[#allocation3 + $0x38] sm:$0xff]
    %v328 = vld [vmem:[#allocation3 + $0x40] sm:$0xff]
    %v329 = vld [vmem:[#allocation3 + $0x48] sm:$0xff]
    %v330 = vld [vmem:[#allocation3 + $0x50] sm:$0xff]
    %v331 = vld [vmem:[#allocation3 + $0x58] sm:$0xff]
    %v332 = vld [vmem:[#allocation3 + $0x60] sm:$0xff]
    %v333 = vld [vmem:[#allocation3 + $0x68] sm:$0xff]
    %v334 = vld [vmem:[#allocation3 + $0x70] sm:$0xff]
    %v335 = vld [vmem:[#allocation3 + $0x78] sm:$0xff]
    %v336 = vld [vmem:[#allocation3 + $0x80] sm:$0xff]
    %v337 = vld [vmem:[#allocation3 + $0x88] sm:$0xff]
    %v338 = vld [vmem:[#allocation3 + $0x90] sm:$0xff]
    %v339 = vld [vmem:[#allocation3 + $0x98] sm:$0xff]
    %v340 = vld [vmem:[#allocation3 + $0xa0] sm:$0xff]
    %v341 = vld [vmem:[#allocation3 + $0xa8] sm:$0xff]
    %v342 = vld [vmem:[#allocation3 + $0xb0] sm:$0xff]
    %v343 = vld [vmem:[#allocation3 + $0xb8] sm:$0xff]
    %v344 = vld [vmem:[#allocation3 + $0xc0] sm:$0xff]
    %v345 = vld [vmem:[#allocation3 + $0xc8] sm:$0xff]
    %v346 = vld [vmem:[#allocation3 + $0xd0] sm:$0xff]
    %v347 = vld [vmem:[#allocation3 + $0xd8] sm:$0xff]
    %v348 = vld [vmem:[#allocation3 + $0xe0] sm:$0xff]
    %v349 = vld [vmem:[#allocation3 + $0xe8] sm:$0xff]
    %v350 = vld [vmem:[#allocation3 + $0xf0] sm:$0xff]
    %v351 = vld [vmem:[#allocation3 + $0xf8] sm:$0xff]
    %v352 = vld [vmem:[#allocation3 + $0x100] sm:$0xff]
    %v353 = vld [vmem:[#allocation3 + $0x108] sm:$0xff]
    %v354 = vld [vmem:[#allocation3 + $0x110] sm:$0xff]
    %v355 = vld [vmem:[#allocation3 + $0x118] sm:$0xff]
    %v356 = vld [vmem:[#allocation3 + $0x120] sm:$0xff]
    %v357 = vld [vmem:[#allocation3 + $0x128] sm:$0xff]
    %v358 = vld [vmem:[#allocation3 + $0x130] sm:$0xff]
    %v359 = vld [vmem:[#allocation3 + $0x138] sm:$0xff]
    %v360 = vld [vmem:[#allocation3 + $0x140] sm:$0xff]
    %v361 = vld [vmem:[#allocation3 + $0x148] sm:$0xff]
    %v362 = vld [vmem:[#allocation3 + $0x150] sm:$0xff]
    %v363 = vld [vmem:[#allocation3 + $0x158] sm:$0xff]
    %v364 = vld [vmem:[#allocation3 + $0x160] sm:$0xff]
    %v365 = vld [vmem:[#allocation3 + $0x168] sm:$0xff]
    %v366 = vld [vmem:[#allocation3 + $0x170] sm:$0xff]
    %v367 = vld [vmem:[#allocation3 + $0x178] sm:$0xff]
    %v368 = vld [vmem:[#allocation3 + $0x180] sm:$0xff]
    %v369 = vld [vmem:[#allocation3 + $0x188] sm:$0xff]
    %v370 = vld [vmem:[#allocation3 + $0x190] sm:$0xff]
    %v371 = vld [vmem:[#allocation3 + $0x198] sm:$0xff]
    %v372 = vld [vmem:[#allocation3 + $0x1a0] sm:$0xff]
    %v373 = vld [vmem:[#allocation3 + $0x1a8] sm:$0xff]
    %v374 = vld [vmem:[#allocation3 + $0x1b0] sm:$0xff]
    %v375 = vld [vmem:[#allocation3 + $0x1b8] sm:$0xff]
    %v376 = vld [vmem:[#allocation3 + $0x1c0] sm:$0xff]
    %v377 = vld [vmem:[#allocation3 + $0x1c8] sm:$0xff]
    %v378 = vld [vmem:[#allocation3 + $0x1d0] sm:$0xff]
    %v379 = vld [vmem:[#allocation3 + $0x1d8] sm:$0xff]
    %v380 = vld [vmem:[#allocation3 + $0x1e0] sm:$0xff]
    %v381 = vld [vmem:[#allocation3 + $0x1e8] sm:$0xff]
    %v382 = vld [vmem:[#allocation3 + $0x1f0] sm:$0xff]
    %v383 = vld [vmem:[#allocation3 + $0x1f8] sm:$0xff]
    %v384 = vld [vmem:[%s4] sm:$0x3]
    %v386 = vlaneseq
    %v387 = vshrl.u32 %v386, 7
    %v388 = vsub.s32 0, %v387
    %v389 = vrot.slane %v384, %v388
    %v390 = vlaneseq
    %v391 = vshrl.u32 %v390, 7
    %v392 = vsub.s32 1, %v391
    %v393 = vrot.slane %v384, %v392
    %396 = vmatprep.subr.mxu0 %v321
    %397 = vmatpush1.msra.mxu0 %v320
    %398 = vmatprep.subr.mxu0 %v323
    %399 = vmatpush1.msra.mxu0 %v322
    %400 = vmatprep.subr.mxu0 %v325
    %401 = vmatpush1.msra.mxu0 %v324
    %402 = vmatprep.subr.mxu0 %v327
    %403 = vmatpush1.msra.mxu0 %v326
    %404 = vmatprep.subr.mxu0 %v329
    %405 = vmatpush1.msra.mxu0 %v328
    %406 = vmatprep.subr.mxu0 %v331
    %407 = vmatpush1.msra.mxu0 %v330
    %408 = vmatprep.subr.mxu0 %v333
    %409 = vmatpush1.msra.mxu0 %v332
    %410 = vmatprep.subr.mxu0 %v335
    %411 = vmatpush1.msra.mxu0 %v334
    %412 = vmatprep.subr.mxu0 %v337
    %413 = vmatpush1.msra.mxu0 %v336
    %414 = vmatprep.subr.mxu0 %v339
    %415 = vmatpush1.msra.mxu0 %v338
    %416 = vmatprep.subr.mxu0 %v341
    %417 = vmatpush1.msra.mxu0 %v340
    %418 = vmatprep.subr.mxu0 %v343
    %419 = vmatpush1.msra.mxu0 %v342
    %420 = vmatprep.subr.mxu0 %v345
    %421 = vmatpush1.msra.mxu0 %v344
    %422 = vmatprep.subr.mxu0 %v347
    %423 = vmatpush1.msra.mxu0 %v346
    %424 = vmatprep.subr.mxu0 %v349
    %425 = vmatpush1.msra.mxu0 %v348
    %426 = vmatprep.subr.mxu0 %v351
    %427 = vmatpush1.msra.mxu0 %v350
    %428 = vmatprep.subr.mxu0 %v353
    %429 = vmatpush1.msra.mxu0 %v352
    %430 = vmatprep.subr.mxu0 %v355
    %431 = vmatpush1.msra.mxu0 %v354
    %432 = vmatprep.subr.mxu0 %v357
    %433 = vmatpush1.msra.mxu0 %v356
    %434 = vmatprep.subr.mxu0 %v359
    %435 = vmatpush1.msra.mxu0 %v358
    %436 = vmatprep.subr.mxu0 %v361
    %437 = vmatpush1.msra.mxu0 %v360
    %438 = vmatprep.subr.mxu0 %v363
    %439 = vmatpush1.msra.mxu0 %v362
    %440 = vmatprep.subr.mxu0 %v365
    %441 = vmatpush1.msra.mxu0 %v364
    %442 = vmatprep.subr.mxu0 %v367
    %443 = vmatpush1.msra.mxu0 %v366
    %444 = vmatprep.subr.mxu0 %v369
    %445 = vmatpush1.msra.mxu0 %v368
    %446 = vmatprep.subr.mxu0 %v371
    %447 = vmatpush1.msra.mxu0 %v370
    %448 = vmatprep.subr.mxu0 %v373
    %449 = vmatpush1.msra.mxu0 %v372
    %450 = vmatprep.subr.mxu0 %v375
    %451 = vmatpush1.msra.mxu0 %v374
    %452 = vmatprep.subr.mxu0 %v377
    %453 = vmatpush1.msra.mxu0 %v376
    %454 = vmatprep.subr.mxu0 %v379
    %455 = vmatpush1.msra.mxu0 %v378
    %456 = vmatprep.subr.mxu0 %v381
    %457 = vmatpush1.msra.mxu0 %v380
    %458 = vmatprep.subr.mxu0 %v383
    %459 = vmatpush1.msra.mxu0 %v382
    %460 = vmatprep.mubr.f32.mxu0 %v289
    %461 = vmatmul.mubr.f32.gmra.mrb[0].mxu0 %v288
    %v462 = vpop.f32.mrb[0].mxu0
    %v463 = vadd.f32 %v389, %v462
    %v464 = vpop.f32.mrb[0].mxu0
    %v465 = vadd.f32 %v393, %v464
    %466 = vmatprep.mubr.f32.mxu0 %v291
    %467 = vmatmul.mubr.f32.gmra.mrb[0].mxu0 %v290
    %v468 = vpop.f32.mrb[0].mxu0
    %v469 = vadd.f32 %v389, %v468
    %v470 = vpop.f32.mrb[0].mxu0
    %v471 = vadd.f32 %v393, %v470
    %472 = vmatprep.mubr.f32.mxu0 %v293
    %473 = vmatmul.mubr.f32.gmra.mrb[0].mxu0 %v292
    %v474 = vpop.f32.mrb[0].mxu0
    %v475 = vadd.f32 %v389, %v474
    %v476 = vpop.f32.mrb[0].mxu0
    %v477 = vadd.f32 %v393, %v476
    %478 = vmatprep.mubr.f32.mxu0 %v295
    %479 = vmatmul.mubr.f32.gmra.mrb[0].mxu0 %v294
    %v480 = vpop.f32.mrb[0].mxu0
    %v481 = vadd.f32 %v389, %v480
    %v482 = vpop.f32.mrb[0].mxu0
    %v483 = vadd.f32 %v393, %v482
    %484 = vmatprep.mubr.f32.mxu0 %v297
    %485 = vmatmul.mubr.f32.gmra.mrb[0].mxu0 %v296
    %v486 = vpop.f32.mrb[0].mxu0
    %v487 = vadd.f32 %v389, %v486
    %v488 = vpop.f32.mrb[0].mxu0
    %v489 = vadd.f32 %v393, %v488
    %490 = vmatprep.mubr.f32.mxu0 %v299
    %491 = vmatmul.mubr.f32.gmra.mrb[0].mxu0 %v298
    %v492 = vpop.f32.mrb[0].mxu0
    %v493 = vadd.f32 %v389, %v492
    %v494 = vpop.f32.mrb[0].mxu0
    %v495 = vadd.f32 %v393, %v494
    %496 = vmatprep.mubr.f32.mxu0 %v301
    %497 = vmatmul.mubr.f32.gmra.mrb[0].mxu0 %v300
    %v498 = vpop.f32.mrb[0].mxu0
    %v499 = vadd.f32 %v389, %v498
    %v500 = vpop.f32.mrb[0].mxu0
    %v501 = vadd.f32 %v393, %v500
    %502 = vmatprep.mubr.f32.mxu0 %v303
    %503 = vmatmul.mubr.f32.gmra.mrb[0].mxu0 %v302
    %v504 = vpop.f32.mrb[0].mxu0
    %v505 = vadd.f32 %v389, %v504
    %v506 = vpop.f32.mrb[0].mxu0
    %v507 = vadd.f32 %v393, %v506
    %508 = vmatprep.mubr.f32.mxu0 %v305
    %509 = vmatmul.mubr.f32.gmra.mrb[0].mxu0 %v304
    %v510 = vpop.f32.mrb[0].mxu0
    %v511 = vadd.f32 %v389, %v510
    %v512 = vpop.f32.mrb[0].mxu0
    %v513 = vadd.f32 %v393, %v512
    %514 = vmatprep.mubr.f32.mxu0 %v307
    %515 = vmatmul.mubr.f32.gmra.mrb[0].mxu0 %v306
    %v516 = vpop.f32.mrb[0].mxu0
    %v517 = vadd.f32 %v389, %v516
    %v518 = vpop.f32.mrb[0].mxu0
    %v519 = vadd.f32 %v393, %v518
    %520 = vmatprep.mubr.f32.mxu0 %v309
    %521 = vmatmul.mubr.f32.gmra.mrb[0].mxu0 %v308
    %v522 = vpop.f32.mrb[0].mxu0
    %v523 = vadd.f32 %v389, %v522
    %v524 = vpop.f32.mrb[0].mxu0
    %v525 = vadd.f32 %v393, %v524
    %526 = vmatprep.mubr.f32.mxu0 %v311
    %527 = vmatmul.mubr.f32.gmra.mrb[0].mxu0 %v310
    %v528 = vpop.f32.mrb[0].mxu0
    %v529 = vadd.f32 %v389, %v528
    %v530 = vpop.f32.mrb[0].mxu0
    %v531 = vadd.f32 %v393, %v530
    %532 = vmatprep.mubr.f32.mxu0 %v313
    %533 = vmatmul.mubr.f32.gmra.mrb[0].mxu0 %v312
    %v534 = vpop.f32.mrb[0].mxu0
    %v535 = vadd.f32 %v389, %v534
    %v536 = vpop.f32.mrb[0].mxu0
    %v537 = vadd.f32 %v393, %v536
    %538 = vmatprep.mubr.f32.mxu0 %v315
    %539 = vmatmul.mubr.f32.gmra.mrb[0].mxu0 %v314
    %v540 = vpop.f32.mrb[0].mxu0
    %v541 = vadd.f32 %v389, %v540
    %v542 = vpop.f32.mrb[0].mxu0
    %v543 = vadd.f32 %v393, %v542
    %544 = vmatprep.mubr.f32.mxu0 %v317
    %545 = vmatmul.mubr.f32.gmra.mrb[0].mxu0 %v316
    %v546 = vpop.f32.mrb[0].mxu0
    %v547 = vadd.f32 %v389, %v546
    %v548 = vpop.f32.mrb[0].mxu0
    %v549 = vadd.f32 %v393, %v548
    %550 = vmatprep.mubr.f32.mxu0 %v319
    %551 = vmatmul.mubr.f32.gmra.mrb[0].mxu0 %v318
    %v552 = vpop.f32.mrb[0].mxu0
    %v553 = vadd.f32 %v389, %v552
    %v554 = vpop.f32.mrb[0].mxu0
    %v555 = vadd.f32 %v393, %v554
    %556 = vdwg.mxu0
    %v557 = vmax.f32 %v463, 0.0
    %v558 = vmax.f32 %v465, 0.0
    %v559 = vmax.f32 %v469, 0.0
    %v560 = vmax.f32 %v471, 0.0
    %v561 = vmax.f32 %v475, 0.0
    %v562 = vmax.f32 %v477, 0.0
    %v563 = vmax.f32 %v481, 0.0
    %v564 = vmax.f32 %v483, 0.0
    %v565 = vmax.f32 %v487, 0.0
    %v566 = vmax.f32 %v489, 0.0
    %v567 = vmax.f32 %v493, 0.0
    %v568 = vmax.f32 %v495, 0.0
    %v569 = vmax.f32 %v499, 0.0
    %v570 = vmax.f32 %v501, 0.0
    %v571 = vmax.f32 %v505, 0.0
    %v572 = vmax.f32 %v507, 0.0
    %v573 = vmax.f32 %v511, 0.0
    %v574 = vmax.f32 %v513, 0.0
    %v575 = vmax.f32 %v517, 0.0
    %v576 = vmax.f32 %v519, 0.0
    %v577 = vmax.f32 %v523, 0.0
    %v578 = vmax.f32 %v525, 0.0
    %v579 = vmax.f32 %v529, 0.0
    %v580 = vmax.f32 %v531, 0.0
    %v581 = vmax.f32 %v535, 0.0
    %v582 = vmax.f32 %v537, 0.0
    %v583 = vmax.f32 %v541, 0.0
    %v584 = vmax.f32 %v543, 0.0
    %v585 = vmax.f32 %v547, 0.0
    %v586 = vmax.f32 %v549, 0.0
    %v587 = vmax.f32 %v553, 0.0
    %v588 = vmax.f32 %v555, 0.0
    %v589 = vld [vmem:[%s5] sm:$0x3]
    %v591 = vlaneseq
    %v592 = vshrl.u32 %v591, 7
    %v593 = vsub.s32 0, %v592
    %v594 = vrot.slane %v589, %v593
    %v595 = vlaneseq
    %v596 = vshrl.u32 %v595, 7
    %v597 = vsub.s32 1, %v596
    %v598 = vrot.slane %v589, %v597
    %v601 = vmul.f32 %v557, %v594
    %v602 = vmul.f32 %v558, %v598
    %v603 = vmul.f32 %v559, %v594
    %v604 = vmul.f32 %v560, %v598
    %v605 = vmul.f32 %v561, %v594
    %v606 = vmul.f32 %v562, %v598
    %v607 = vmul.f32 %v563, %v594
    %v608 = vmul.f32 %v564, %v598
    %v609 = vmul.f32 %v565, %v594
    %v610 = vmul.f32 %v566, %v598
    %v611 = vmul.f32 %v567, %v594
    %v612 = vmul.f32 %v568, %v598
    %v613 = vmul.f32 %v569, %v594
    %v614 = vmul.f32 %v570, %v598
    %v615 = vmul.f32 %v571, %v594
    %v616 = vmul.f32 %v572, %v598
    %v617 = vmul.f32 %v573, %v594
    %v618 = vmul.f32 %v574, %v598
    %v619 = vmul.f32 %v575, %v594
    %v620 = vmul.f32 %v576, %v598
    %v621 = vmul.f32 %v577, %v594
    %v622 = vmul.f32 %v578, %v598
    %v623 = vmul.f32 %v579, %v594
    %v624 = vmul.f32 %v580, %v598
    %v625 = vmul.f32 %v581, %v594
    %v626 = vmul.f32 %v582, %v598
    %v627 = vmul.f32 %v583, %v594
    %v628 = vmul.f32 %v584, %v598
    %v629 = vmul.f32 %v585, %v594
    %v630 = vmul.f32 %v586, %v598
    %v631 = vmul.f32 %v587, %v594
    %v632 = vmul.f32 %v588, %v598
    %v633 = vadd.f32 %v601, %v602
    %634 = vadd.xlane.f32.xlu0 %v633
    %v635 = vpop.xlane.xlu0 %634
    %v636 = vadd.f32 %v603, %v604
    %637 = vadd.xlane.f32.xlu0 %v636
    %v638 = vpop.xlane.xlu0 %637
    %v639 = vadd.f32 %v605, %v606
    %640 = vadd.xlane.f32.xlu0 %v639
    %v641 = vpop.xlane.xlu0 %640
    %v642 = vadd.f32 %v607, %v608
    %643 = vadd.xlane.f32.xlu0 %v642
    %v644 = vpop.xlane.xlu0 %643
    %v645 = vadd.f32 %v609, %v610
    %646 = vadd.xlane.f32.xlu0 %v645
    %v647 = vpop.xlane.xlu0 %646
    %v648 = vadd.f32 %v611, %v612
    %649 = vadd.xlane.f32.xlu0 %v648
    %v650 = vpop.xlane.xlu0 %649
    %v651 = vadd.f32 %v613, %v614
    %652 = vadd.xlane.f32.xlu0 %v651
    %v653 = vpop.xlane.xlu0 %652
    %v654 = vadd.f32 %v615, %v616
    %655 = vadd.xlane.f32.xlu0 %v654
    %v656 = vpop.xlane.xlu0 %655
    %v657 = vadd.f32 %v617, %v618
    %658 = vadd.xlane.f32.xlu0 %v657
    %v659 = vpop.xlane.xlu0 %658
    %v660 = vadd.f32 %v619, %v620
    %661 = vadd.xlane.f32.xlu0 %v660
    %v662 = vpop.xlane.xlu0 %661
    %v663 = vadd.f32 %v621, %v622
    %664 = vadd.xlane.f32.xlu0 %v663
    %v665 = vpop.xlane.xlu0 %664
    %v666 = vadd.f32 %v623, %v624
    %667 = vadd.xlane.f32.xlu0 %v666
    %v668 = vpop.xlane.xlu0 %667
    %v669 = vadd.f32 %v625, %v626
    %670 = vadd.xlane.f32.xlu0 %v669
    %v671 = vpop.xlane.xlu0 %670
    %v672 = vadd.f32 %v627, %v628
    %673 = vadd.xlane.f32.xlu0 %v672
    %v674 = vpop.xlane.xlu0 %673
    %v675 = vadd.f32 %v629, %v630
    %676 = vadd.xlane.f32.xlu0 %v675
    %v677 = vpop.xlane.xlu0 %676
    %v678 = vadd.f32 %v631, %v632
    %679 = vadd.xlane.f32.xlu0 %v678
    %v680 = vpop.xlane.xlu0 %679
    %v681 = vld [vmem:[#allocation2] sm:$0x1]
    %v683 = vlaneseq
    %v684 = vshrl.u32 %v683, 7
    %v685 = vsub.s32 0, %v684
    %v686 = vrot.slane %v681, %v685
    %v688 = vadd.f32 %v635, %v686
    %v689 = vadd.f32 %v638, %v686
    %v690 = vadd.f32 %v641, %v686
    %v691 = vadd.f32 %v644, %v686
    %v692 = vadd.f32 %v647, %v686
    %v693 = vadd.f32 %v650, %v686
    %v694 = vadd.f32 %v653, %v686
    %v695 = vadd.f32 %v656, %v686
    %v696 = vadd.f32 %v659, %v686
    %v697 = vadd.f32 %v662, %v686
    %v698 = vadd.f32 %v665, %v686
    %v699 = vadd.f32 %v668, %v686
    %v700 = vadd.f32 %v671, %v686
    %v701 = vadd.f32 %v674, %v686
    %v702 = vadd.f32 %v677, %v686
    %v703 = vadd.f32 %v680, %v686
    %vm704 = vcmask 7168
    %705 = vst.msk [vmem:[%s7] sm:$0xff] %vm704, %v688
    %706 = vst.msk [vmem:[%s7 + $0x8] sm:$0xff] %vm704, %v689
    %707 = vst.msk [vmem:[%s7 + $0x10] sm:$0xff] %vm704, %v690
    %708 = vst.msk [vmem:[%s7 + $0x18] sm:$0xff] %vm704, %v691
    %709 = vst.msk [vmem:[%s7 + $0x20] sm:$0xff] %vm704, %v692
    %710 = vst.msk [vmem:[%s7 + $0x28] sm:$0xff] %vm704, %v693
    %711 = vst.msk [vmem:[%s7 + $0x30] sm:$0xff] %vm704, %v694
    %712 = vst.msk [vmem:[%s7 + $0x38] sm:$0xff] %vm704, %v695
    %713 = vst.msk [vmem:[%s7 + $0x40] sm:$0xff] %vm704, %v696
    %714 = vst.msk [vmem:[%s7 + $0x48] sm:$0xff] %vm704, %v697
    %715 = vst.msk [vmem:[%s7 + $0x50] sm:$0xff] %vm704, %v698
    %716 = vst.msk [vmem:[%s7 + $0x58] sm:$0xff] %vm704, %v699
    %717 = vst.msk [vmem:[%s7 + $0x60] sm:$0xff] %vm704, %v700
    %718 = vst.msk [vmem:[%s7 + $0x68] sm:$0xff] %vm704, %v701
    %719 = vst.msk [vmem:[%s7 + $0x70] sm:$0xff] %vm704, %v702
    %720 = vst.msk [vmem:[%s7 + $0x78] sm:$0xff] %vm704, %v703
    // Predicated region
    $region34: #{tpu_custom_call.1} parent=1 // pred_check
      _
    $region35: #{tpu_custom_call.1} parent=1 // pred_check_branch
      %722 = sbr.rel (0) target = $region37
    $region36: #{tpu_custom_call.1} parent=1 // pred_region
      _
    $region37: #{tpu_custom_call.1} parent=1 // pred_fallthru
      _
    // Predicated region
    $region38: #{tpu_custom_call.1} parent=1 // pred_check
      _
    $region39: #{tpu_custom_call.1} parent=1 // pred_check_branch
      %724 = sbr.rel (0) target = $region41
    $region40: #{tpu_custom_call.1} parent=1 // pred_region
      _
    $region41: #{tpu_custom_call.1} parent=1 // pred_fallthru
      _
    %725 = vsyncpa [#allocation4], 1

</llo_original>
